<compile_context>
chip_gen: v7x
topology: tpu7x:2x2x1
jax: 0.10.0
libtpu: 0.0.40
codegen_flags: <defaults>
</compile_context>

<pallas_src>
import functools

import jax
import jax.numpy as jnp
from jax.experimental import pallas as pl
from jax.experimental.pallas import tpu as pltpu

_SUB = 8                    # sublanes per vreg
_FOLD = _SUB * 128          # tile granularity: 8 sublanes x 128 lanes = 1024 samples


def _round_up(n, m):
    return ((n + m - 1) // m) * m


def _cdiv(a, b):
    return -(-a // b)


def _ce_kernel(xt_ref, idx_ref, out_ref, *, num_classes):
    # xt_ref  : (C*8, T/8) logits  -- class c lives in sublane rows [c*8, c*8+8)
    # idx_ref : (8,   T/8) int32 class indices (precomputed in wrapper)
    # out_ref : (8,   T/8) per-sample loss
    idx = idx_ref[...]                                         # (8, T/8) int32
    x = xt_ref[...].astype(jnp.float32)                        # (C*8, T/8)

    # Numerically-stable logsumexp over classes + target-logit select,
    # statically unrolled over the (tiny) class axis.  All slices are
    # 8-sublane aligned -> pure dense VPU/EUP work, no relayouts.
    m = x[0:_SUB, :]
    for c in range(1, num_classes):
        m = jnp.maximum(m, x[c * _SUB:(c + 1) * _SUB, :])      # (8, T/8) running max

    s = jnp.zeros_like(m)
    tgt = jnp.zeros_like(m)
    for c in range(num_classes):
        xc = x[c * _SUB:(c + 1) * _SUB, :]
        s = s + jnp.exp(xc - m)                                # sum of exp(x - max)
        tgt = jnp.where(idx == c, xc, tgt)                     # select target logit

    # loss = logsumexp(x) - x[target]
    out_ref[...] = (m + jnp.log(s) - tgt).astype(out_ref.dtype)


def cross_entropy_loss(x, label, num_classes=5, tile_n=65536, out_dtype=jnp.float32):
    """Pallas equivalent of CrossEntropy.forward (reduction='none').

    x:     (N, num_classes) logits (any float dtype; cast to f32 in-kernel)
    label: (N,) "soft" labels in [0, 1] on the 1/(num_classes-1) grid
    Returns (N,) loss in `out_dtype` (default float32, matching torch).
    """
    gap = float(1.0 / (num_classes - 1))
    N, C = x.shape
    assert C == num_classes, (C, num_classes)

    # Tile sizing: multiple of 1024 (sublane fold needs 8*128), as large as fits
    # the requested tile_n / the problem.  Prefer an even tile count when the
    # grid splits, so v7x's two TensorCores get equal work.
    tile = max(_FOLD, min(_round_up(tile_n, _FOLD), _round_up(N, _FOLD)))
    num_tiles = _cdiv(N, tile)
    if num_tiles > 1 and num_tiles % 2 == 1:
        alt_tile = max(_FOLD, _round_up(_cdiv(N, num_tiles + 1), _FOLD))
        if _cdiv(N, alt_tile) % 2 == 0:
            tile = alt_tile
            num_tiles = _cdiv(N, alt_tile)
    n_pad = num_tiles * tile
    cols = n_pad // _SUB          # lanes per sublane-row over the whole batch
    tcols = tile // _SUB          # lanes per sublane-row per tile (multiple of 128)

    # Layout plumbing (not compute): classes -> 8-row sublane groups, batch folded
    # onto 8 sublanes x lanes.  Logits keep their native dtype over HBM.
    x_t = jnp.pad(jnp.transpose(x), ((0, 0), (0, n_pad - N))).reshape(C * _SUB, cols)

    # Precompute the class index once in the wrapper (int32): removes the per-tile
    # f32 divide and lets the in-kernel selects compare integers.
    # float->int cast truncates toward zero, matching torch's .long().
    idx = (label.astype(jnp.float32) / jnp.float32(gap)).astype(jnp.int32)
    idx = jnp.pad(idx, (0, n_pad - N)).reshape(_SUB, cols)

    out = pl.pallas_call(
        functools.partial(_ce_kernel, num_classes=num_classes),
        out_shape=jax.ShapeDtypeStruct((_SUB, cols), out_dtype),
        grid=(num_tiles,),
        in_specs=[
            pl.BlockSpec((C * _SUB, tcols), lambda i: (0, i)),   # folded logits tile
            pl.BlockSpec((_SUB, tcols), lambda i: (0, i)),       # folded int32 labels
        ],
        out_specs=pl.BlockSpec((_SUB, tcols), lambda i: (0, i)),  # dense loss tile
        compiler_params=pltpu.CompilerParams(
            dimension_semantics=("parallel",),     # shard grid across TCs on v7x
            vmem_limit_bytes=32 * 1024 * 1024,     # ~56*tile bytes used; v5e default is 16 MiB
        ),
    )(x_t, idx)

    # Unfold: (8, n_pad//8) -> (n_pad,) restores original sample order; drop padding.
    return out.reshape(n_pad)[:N]


def _reference(x, label, num_classes=5):
    gap = jnp.float32(1.0 / (num_classes - 1))
    idx = (label.astype(jnp.float32) / gap).astype(jnp.int32)
    logp = jax.nn.log_softmax(x.astype(jnp.float32), axis=-1)
    return -jnp.take_along_axis(logp, idx[:, None], axis=-1)[:, 0]


if __name__ == "__main__":
    num_classes = 5

    key = jax.random.PRNGKey(0)
    k1, k2, k3, k4 = jax.random.split(key, 4)

    # Small shape consistent with the module: batch of 8 rows of 5-class logits;
    # labels are "soft" scores on the gap grid (0, .25, .5, .75, 1.0).
    N = 8
    x = jax.random.normal(k1, (N, num_classes), dtype=jnp.float32)
    label = (jax.random.randint(k2, (N,), 0, num_classes).astype(jnp.float32)
             / jnp.float32(num_classes - 1))

    loss = jax.block_until_ready(cross_entropy_loss(x, label, num_classes=num_classes))
    ref = _reference(x, label, num_classes=num_classes)
    assert loss.shape == (N,)
    assert jnp.allclose(loss, ref, atol=1e-5, rtol=1e-5), (loss, ref)

    # Multi-tile + ragged-N path (exercises grid, padding, sublane fold across tiles).
    N2 = 5000
    x2 = jax.random.normal(k3, (N2, num_classes), dtype=jnp.float32)
    label2 = (jax.random.randint(k4, (N2,), 0, num_classes).astype(jnp.float32)
              / jnp.float32(num_classes - 1))
    loss2 = jax.block_until_ready(
        cross_entropy_loss(x2, label2, num_classes=num_classes, tile_n=2048))
    ref2 = _reference(x2, label2, num_classes=num_classes)
    assert loss2.shape == (N2,)
    assert jnp.allclose(loss2, ref2, atol=1e-5, rtol=1e-5)

    print("KERNEL_OK")
</pallas_src>

<mosaic_0001>
module attributes {stable_mosaic.version = 11 : i64} {
  func.func @_ce_kernel(%arg0: i32, %arg1: memref<40x128xf32, #tpu.memory_space<vmem>>, %arg2: memref<8x128xi32, #tpu.memory_space<vmem>>, %arg3: memref<8x128xf32, #tpu.memory_space<vmem>>) attributes {dimension_semantics = [#tpu.dimension_semantics<parallel>], iteration_bounds = array<i64: 1>, scalar_prefetch = 0 : i64, scratch_operands = 0 : i64, tpu.core_type = #tpu.core_type<tc>, window_params = [{transform_indices = @transform_0, window_bounds = array<i64: 40, 128>}, {transform_indices = @transform_1, window_bounds = array<i64: 8, 128>}, {transform_indices = @transform_2, window_bounds = array<i64: 8, 128>}]} {
    %c0 = arith.constant 0 : index
    %c0_0 = arith.constant 0 : index
    %0 = vector.load %arg2[%c0, %c0_0] : memref<8x128xi32, #tpu.memory_space<vmem>>, vector<8x128xi32>
    %c0_1 = arith.constant 0 : index
    %c0_2 = arith.constant 0 : index
    %1 = vector.load %arg1[%c0_1, %c0_2] : memref<40x128xf32, #tpu.memory_space<vmem>>, vector<40x128xf32>
    %2 = vector.extract_strided_slice %1 {offsets = [0, 0], sizes = [8, 128], strides = [1, 1]} : vector<40x128xf32> to vector<8x128xf32>
    %3 = vector.extract_strided_slice %1 {offsets = [8, 0], sizes = [8, 128], strides = [1, 1]} : vector<40x128xf32> to vector<8x128xf32>
    %4 = arith.maximumf %2, %3 : vector<8x128xf32>
    %5 = vector.extract_strided_slice %1 {offsets = [16, 0], sizes = [8, 128], strides = [1, 1]} : vector<40x128xf32> to vector<8x128xf32>
    %6 = arith.maximumf %4, %5 : vector<8x128xf32>
    %7 = vector.extract_strided_slice %1 {offsets = [24, 0], sizes = [8, 128], strides = [1, 1]} : vector<40x128xf32> to vector<8x128xf32>
    %8 = arith.maximumf %6, %7 : vector<8x128xf32>
    %9 = vector.extract_strided_slice %1 {offsets = [32, 0], sizes = [8, 128], strides = [1, 1]} : vector<40x128xf32> to vector<8x128xf32>
    %10 = arith.maximumf %8, %9 : vector<8x128xf32>
    %cst = arith.constant 0.000000e+00 : f32
    %11 = vector.broadcast %cst : f32 to vector<8x128xf32>
    %cst_3 = arith.constant 0.000000e+00 : f32
    %12 = vector.broadcast %cst_3 : f32 to vector<8x128xf32>
    %13 = vector.extract_strided_slice %1 {offsets = [0, 0], sizes = [8, 128], strides = [1, 1]} : vector<40x128xf32> to vector<8x128xf32>
    %14 = arith.subf %13, %10 : vector<8x128xf32>
    %15 = math.exp %14 : vector<8x128xf32>
    %16 = arith.addf %11, %15 : vector<8x128xf32>
    %c0_i32 = arith.constant 0 : i32
    %17 = vector.broadcast %c0_i32 : i32 to vector<8x128xi32>
    %18 = arith.cmpi eq, %0, %17 : vector<8x128xi32>
    %19 = arith.select %18, %13, %12 : vector<8x128xi1>, vector<8x128xf32>
    %20 = vector.extract_strided_slice %1 {offsets = [8, 0], sizes = [8, 128], strides = [1, 1]} : vector<40x128xf32> to vector<8x128xf32>
    %21 = arith.subf %20, %10 : vector<8x128xf32>
    %22 = math.exp %21 : vector<8x128xf32>
    %23 = arith.addf %16, %22 : vector<8x128xf32>
    %c1_i32 = arith.constant 1 : i32
    %24 = vector.broadcast %c1_i32 : i32 to vector<8x128xi32>
    %25 = arith.cmpi eq, %0, %24 : vector<8x128xi32>
    %26 = arith.select %25, %20, %19 : vector<8x128xi1>, vector<8x128xf32>
    %27 = vector.extract_strided_slice %1 {offsets = [16, 0], sizes = [8, 128], strides = [1, 1]} : vector<40x128xf32> to vector<8x128xf32>
    %28 = arith.subf %27, %10 : vector<8x128xf32>
    %29 = math.exp %28 : vector<8x128xf32>
    %30 = arith.addf %23, %29 : vector<8x128xf32>
    %c2_i32 = arith.constant 2 : i32
    %31 = vector.broadcast %c2_i32 : i32 to vector<8x128xi32>
    %32 = arith.cmpi eq, %0, %31 : vector<8x128xi32>
    %33 = arith.select %32, %27, %26 : vector<8x128xi1>, vector<8x128xf32>
    %34 = vector.extract_strided_slice %1 {offsets = [24, 0], sizes = [8, 128], strides = [1, 1]} : vector<40x128xf32> to vector<8x128xf32>
    %35 = arith.subf %34, %10 : vector<8x128xf32>
    %36 = math.exp %35 : vector<8x128xf32>
    %37 = arith.addf %30, %36 : vector<8x128xf32>
    %c3_i32 = arith.constant 3 : i32
    %38 = vector.broadcast %c3_i32 : i32 to vector<8x128xi32>
    %39 = arith.cmpi eq, %0, %38 : vector<8x128xi32>
    %40 = arith.select %39, %34, %33 : vector<8x128xi1>, vector<8x128xf32>
    %41 = vector.extract_strided_slice %1 {offsets = [32, 0], sizes = [8, 128], strides = [1, 1]} : vector<40x128xf32> to vector<8x128xf32>
    %42 = arith.subf %41, %10 : vector<8x128xf32>
    %43 = math.exp %42 : vector<8x128xf32>
    %44 = arith.addf %37, %43 : vector<8x128xf32>
    %c4_i32 = arith.constant 4 : i32
    %45 = vector.broadcast %c4_i32 : i32 to vector<8x128xi32>
    %46 = arith.cmpi eq, %0, %45 : vector<8x128xi32>
    %47 = arith.select %46, %41, %40 : vector<8x128xi1>, vector<8x128xf32>
    %48 = math.log %44 : vector<8x128xf32>
    %49 = arith.addf %10, %48 : vector<8x128xf32>
    %50 = arith.subf %49, %47 : vector<8x128xf32>
    %c0_4 = arith.constant 0 : index
    %c0_5 = arith.constant 0 : index
    %51 = vector.load %arg3[%c0_4, %c0_5] : memref<8x128xf32, #tpu.memory_space<vmem>>, vector<8x128xf32>
    tpu.vector_store %arg3[%c0_4, %c0_5], %50 {strides = array<i32>} : memref<8x128xf32, #tpu.memory_space<vmem>>, vector<8x128xf32>,
    return
  }
  func.func @transform_0(%arg0: i32) -> (i32, i32) {
    %c0_i32 = arith.constant 0 : i32
    %c0_i32_0 = arith.constant 0 : i32
    return %c0_i32, %arg0 : i32, i32
  }
  func.func @transform_1(%arg0: i32) -> (i32, i32) {
    %c0_i32 = arith.constant 0 : i32
    %c0_i32_0 = arith.constant 0 : i32
    return %c0_i32, %arg0 : i32, i32
  }
  func.func @transform_2(%arg0: i32) -> (i32, i32) {
    %c0_i32 = arith.constant 0 : i32
    %c0_i32_0 = arith.constant 0 : i32
    return %c0_i32, %arg0 : i32, i32
  }
}

</mosaic_0001>

<llo_original>
// kernel: tpu_custom_call.1
$region0: #{tpu_custom_call.1}
  #allocation0 [shape = 'u32[]', space=smem, size = 0x4, offset = 0x4, fixed_abs, tag = 'smem constant byte address 0x4 - core index']
  #allocation1 [shape = 'u32[144,128]{1,0:T(1,128)}', space=vmem, size = 0x12000, scoped, tag = 'internal scratch']
  %s0 = inlined_call_operand.hbm [shape: f32[40,128], index: 0, kind: input, shape index: {}]
  %s1 = inlined_call_operand.hbm [shape: s32[8,128], index: 1, kind: input, shape index: {}]
  %s2 = inlined_call_operand.hbm [shape: f32[8,128], index: 2, kind: output, shape index: {}]
  %s3 = sld [smem:[#allocation0]]
  $region26: #{tpu_custom_call.1} parent=0
    _
  %s5 = ssub.s32 1, %s3
  %s6 = scalar_select 0, %s5, %s3
  $region1: #{tpu_custom_call.1} parent=0
    #allocation2 [shape = 'u8[20480]{0}', space=vmem, size = 0x5000, scoped, tag = 'input window, operand 0, single buffered']
    #allocation3 [shape = 's32[1]{0}', space=sflag, size = 0x4, scoped, tag = 'scoped memory for tpu_custom_call.1']
    #allocation4 [shape = 's32[1]{0}', space=sflag, size = 0x4, scoped, tag = 'scoped memory for tpu_custom_call.1']
    #allocation5 [shape = 'u8[4096]{0}', space=vmem, size = 0x1000, scoped, tag = 'input window, operand 1, single buffered']
    #allocation6 [shape = 's32[1]{0}', space=sflag, size = 0x4, scoped, tag = 'scoped memory for tpu_custom_call.1']
    #allocation7 [shape = 'u8[4096]{0}', space=vmem, size = 0x1000, scoped, tag = 'output window, operand 0, single buffered']
    %7 = vsyncpa [#allocation3], 0
    %8 = vsyncpa [#allocation6], 0
    %9 = vsyncpa [#allocation4], 0
    // Predicated region
    $region2: #{tpu_custom_call.1} parent=1 // pred_check
      _
    $region3: #{tpu_custom_call.1} parent=1 // pred_check_branch
      %11 = sbr.rel (0) target = $region5
    $region4: #{tpu_custom_call.1} parent=1 // pred_region
      %s13 = ssub.s32 640, 640
      %14 = vsyncadd [#allocation3], %s13
      %s15 = sshll.u32 [#allocation2], 4
      %s16 = int_to_ptr.vmem [resolvable:$true] %s15
      %21 = dma.hbm_to_vmem [thread:$0]  %s0, 640, %s16, [#allocation3], 128, 128, 8
    $region5: #{tpu_custom_call.1} parent=1 // pred_fallthru
      _
    // Predicated region
    $region6: #{tpu_custom_call.1} parent=1 // pred_check
      _
    $region7: #{tpu_custom_call.1} parent=1 // pred_check_branch
      %23 = sbr.rel (0) target = $region9
    $region8: #{tpu_custom_call.1} parent=1 // pred_region
      %s25 = ssub.s32 128, 128
      %26 = vsyncadd [#allocation6], %s25
      %s28 = sshll.u32 [#allocation5], 4
      %s29 = int_to_ptr.vmem [resolvable:$true] %s28
      %31 = dma.hbm_to_vmem [thread:$0]  %s1, 128, %s29, [#allocation6]
    $region9: #{tpu_custom_call.1} parent=1 // pred_fallthru
      _
    // Predicated region
    $region10: #{tpu_custom_call.1} parent=1 // pred_check
      _
    $region11: #{tpu_custom_call.1} parent=1 // pred_check_branch
      %33 = sbr.rel (0) target = $region13
    $region12: #{tpu_custom_call.1} parent=1 // pred_region
      %34 = dma.done [#allocation3], 640
    $region13: #{tpu_custom_call.1} parent=1 // pred_fallthru
      _
    // Predicated region
    $region14: #{tpu_custom_call.1} parent=1 // pred_check
      _
    $region15: #{tpu_custom_call.1} parent=1 // pred_check_branch
      %36 = sbr.rel (0) target = $region17
    $region16: #{tpu_custom_call.1} parent=1 // pred_region
      %37 = dma.done [#allocation6], 128
    $region17: #{tpu_custom_call.1} parent=1 // pred_fallthru
      _
    %v38 = vld [vmem:[#allocation5] sm:$0xff]
    %v39 = vld [vmem:[#allocation2] sm:$0xff]
    %v40 = vld [vmem:[#allocation2 + $0x8] sm:$0xff]
    %v41 = vld [vmem:[#allocation2 + $0x10] sm:$0xff]
    %v42 = vld [vmem:[#allocation2 + $0x18] sm:$0xff]
    %v43 = vld [vmem:[#allocation2 + $0x20] sm:$0xff]
    %v44 = vmax.f32 %v39, %v40
    %v45 = vmax.f32 %v44, %v41
    %v46 = vmax.f32 %v45, %v42
    %v47 = vmax.f32 %v46, %v43
    %v48 = vsub.f32 %v39, %v47
    %v49 = vmul.f32 %v48, 1.442695
    %v50 = vpow.pop %v49
    %v51 = vadd.f32 %v50, 0.0
    %vm52 = vcmp.eq.s32.totalorder %v38, 0
    %v53 = vsel %vm52, %v39, 0.0
    %v54 = vsub.f32 %v40, %v47
    %v55 = vmul.f32 %v54, 1.442695
    %v56 = vpow.pop %v55
    %v57 = vadd.f32 %v51, %v56
    %vm58 = vcmp.eq.s32.totalorder %v38, 1
    %v59 = vsel %vm58, %v40, %v53
    %v60 = vsub.f32 %v41, %v47
    %v61 = vmul.f32 %v60, 1.442695
    %v62 = vpow.pop %v61
    %v63 = vadd.f32 %v57, %v62
    %vm64 = vcmp.eq.s32.totalorder %v38, 2
    %v65 = vsel %vm64, %v41, %v59
    %v66 = vsub.f32 %v42, %v47
    %v67 = vmul.f32 %v66, 1.442695
    %v68 = vpow.pop %v67
    %v69 = vadd.f32 %v63, %v68
    %vm70 = vcmp.eq.s32.totalorder %v38, 3
    %v71 = vsel %vm70, %v42, %v65
    %v72 = vsub.f32 %v43, %v47
    %v73 = vmul.f32 %v72, 1.442695
    %v74 = vpow.pop %v73
    %v75 = vadd.f32 %v69, %v74
    %vm76 = vcmp.eq.s32.totalorder %v38, 4
    %v77 = vsel %vm76, %v43, %v71
    %v78 = vlog2.pop %v75
    %v79 = vmul.f32 %v78, 0.6931472
    %v80 = vadd.f32 %v47, %v79
    %v81 = vsub.f32 %v80, %v77
    %82 = vst [vmem:[#allocation7] sm:$0xff] %v81
    // Predicated region
    $region18: #{tpu_custom_call.1} parent=1 // pred_check
      _
    $region19: #{tpu_custom_call.1} parent=1 // pred_check_branch
      %84 = sbr.rel (0) target = $region21
    $region20: #{tpu_custom_call.1} parent=1 // pred_region
      %s86 = ssub.s32 128, 128
      %87 = vsyncadd [#allocation4], %s86
      %s89 = sshll.u32 [#allocation7], 4
      %s90 = int_to_ptr.vmem [resolvable:$true] %s89
      %92 = dma.vmem_to_hbm [thread:$0]  %s90, 128, %s2, [#allocation4]
    $region21: #{tpu_custom_call.1} parent=1 // pred_fallthru
      _
    // Predicated region
    $region22: #{tpu_custom_call.1} parent=1 // pred_check
      _
    $region23: #{tpu_custom_call.1} parent=1 // pred_check_branch
      %94 = sbr.rel (0) target = $region25
    $region24: #{tpu_custom_call.1} parent=1 // pred_region
      %95 = dma.done [#allocation4], 128
    $region25: #{tpu_custom_call.1} parent=1 // pred_fallthru
      _
    %96 = vsyncpa [#allocation3], 1
    %97 = vsyncpa [#allocation6], 1
    %98 = vsyncpa [#allocation4], 1

</llo_original>
